<compile_context>
chip_gen: v7x
topology: tpu7x:2x2x1
jax: 0.10.0
libtpu: 0.0.40
codegen_flags: <defaults>
</compile_context>

<pallas_src>
import functools
from typing import NamedTuple

import jax
import jax.numpy as jnp
from jax.experimental import pallas as pl
from jax.experimental.pallas import tpu as pltpu


def _round_up(v, m):
    return ((v + m - 1) // m) * m


def _cdiv(a, b):
    return -(-a // b)


def _vmem_capacity_bytes():
    try:
        cap = getattr(pltpu.get_tpu_info(), "vmem_capacity_bytes", None)
        if cap:
            return int(cap)
    except Exception:
        pass
    return 64 * 1024 * 1024  # conservative default (v7x per-TC VMEM)


class PoolPlan(NamedTuple):
    m: int
    k: int
    c: int
    mp: int
    kp: int
    cp: int
    tm: int
    tk: int
    tn: int
    x_resident: bool
    a_buffers: int
    operand_dtype: str
    vmem_cap: int


def _plan_pooling(m, k, c, x_dtype, operand_dtype,
                  max_tk=None, force_x_resident=None):
    """Generation-aware tile plan for the out = A @ x pooling matmul."""
    op_isz = jnp.dtype(operand_dtype).itemsize
    out_isz = jnp.dtype(x_dtype).itemsize
    use_acc = jnp.dtype(x_dtype) != jnp.dtype(jnp.float32)

    vmem_cap = _vmem_capacity_bytes()
    budget = (48 << 20) if vmem_cap <= (64 << 20) else (96 << 20)

    # Lane (last) dims: dense multiples of 128 -> unmasked stores, full MXU tiles.
    cp = _round_up(c, 128)
    tn = min(cp, 512)
    cp = _round_up(cp, tn)

    # Output sublane dim: big tiles cut grid-step overhead, but keep >= 2
    # i-blocks so the 'parallel' axis can shard across v7x's two TensorCores.
    mp = _round_up(m, 8)
    tm = mp if mp <= 8 else min(512, _round_up(_cdiv(mp, 2), 8))
    mp = _round_up(mp, tm)

    out_bytes = 2 * tm * tn * out_isz + (tm * tn * 4 if use_acc else 0)

    # x residency: keep the whole (K, tn) panel in VMEM when it fits
    # (counted double-buffered for safety), leaving at least half for A tiles.
    kp128 = _round_up(k, 128)
    x_panel_bytes = 2 * kp128 * tn * op_isz
    x_resident = x_panel_bytes <= max(budget - out_bytes, 0) // 2
    if force_x_resident is not None:
        x_resident = bool(force_x_resident)

    # K tile: as large as the VMEM budget allows (3-deep A buffering budgeted).
    tk_target = 1024 if op_isz <= 2 else 512
    if max_tk is not None:
        tk_target = min(tk_target, int(max_tk))
    if x_resident:
        avail = budget - out_bytes - x_panel_bytes
        per_tk = 3 * tm * op_isz
    else:
        avail = budget - out_bytes
        per_tk = 3 * tm * op_isz + 2 * tn * op_isz
    tk_fit = (max(avail, 0) // max(per_tk, 1)) // 128 * 128
    tk = max(128, min(tk_target, tk_fit if tk_fit > 0 else 128, kp128))
    kp = _round_up(k, tk)
    kl = kp // tk
    a_buffers = 3 if kl >= 3 else 2

    return PoolPlan(m=int(m), k=int(k), c=int(c), mp=mp, kp=kp, cp=cp,
                    tm=tm, tk=tk, tn=tn, x_resident=bool(x_resident),
                    a_buffers=a_buffers,
                    operand_dtype=jnp.dtype(operand_dtype).name,
                    vmem_cap=vmem_cap)


def _pool_matmul_kernel(*refs, tk, x_resident, use_acc):
    # refs = (a_ref, x_ref, o_ref[, acc_ref])
    #   a_ref : (tm, tk) tile of pooling operator A [N_coarse, N_fine]
    #   x_ref : (tk, tn) tile of x, or the VMEM-resident (kp, tn) panel
    #   o_ref : (tm, tn) output tile (resident across the K grid axis)
    #   acc_ref: f32 scratch, only present when the output dtype is not f32
    if use_acc:
        a_ref, x_ref, o_ref, acc_ref = refs
    else:
        a_ref, x_ref, o_ref = refs
        acc_ref = o_ref  # f32 output block doubles as the accumulator

    l = pl.program_id(2)

    @pl.when(l == 0)
    def _init():
        acc_ref[...] = jnp.zeros_like(acc_ref)

    if x_resident:
        start = pl.multiple_of(l * tk, 128)
        x_blk = x_ref[pl.ds(start, tk), :]
    else:
        x_blk = x_ref[...]

    acc_ref[...] += jnp.dot(a_ref[...], x_blk,
                            preferred_element_type=jnp.float32)

    if use_acc:
        @pl.when(l == pl.num_programs(2) - 1)
        def _finalize():
            o_ref[...] = acc_ref[...].astype(o_ref.dtype)


def _pooling_matmul(a_p, x_p, plan, out_dtype):
    mp, kp, cp = plan.mp, plan.kp, plan.cp
    tm, tk, tn = plan.tm, plan.tk, plan.tn
    kl = kp // tk
    grid = (mp // tm, cp // tn, kl)

    op_dtype = jnp.dtype(plan.operand_dtype)
    out_dtype = jnp.dtype(out_dtype)
    use_acc = out_dtype != jnp.dtype(jnp.float32)

    # A stream along the reduction axis: 3-deep buffering when there are enough
    # K steps to hide DMA jitter; default double-buffering otherwise.
    if plan.a_buffers > 2:
        a_spec = pl.BlockSpec((tm, tk), lambda i, j, l: (i, l),
                              pipeline_mode=pl.Buffered(plan.a_buffers))
    else:
        a_spec = pl.BlockSpec((tm, tk), lambda i, j, l: (i, l))

    if plan.x_resident:
        # Full K panel of x resident in VMEM: block index invariant in i and l,
        # so Pallas fetches it once per j panel instead of m/tm * kl times.
        x_spec = pl.BlockSpec((kp, tn), lambda i, j, l: (0, j))
    else:
        x_spec = pl.BlockSpec((tk, tn), lambda i, j, l: (l, j))

    out_spec = pl.BlockSpec((tm, tn), lambda i, j, l: (i, j))
    scratch = [pltpu.VMEM((tm, tn), jnp.float32)] if use_acc else []

    op_isz = op_dtype.itemsize
    out_isz = out_dtype.itemsize
    a_bytes = (cp // tn) * mp * kp * op_isz                 # A: once per j panel
    x_bytes = (kp * cp if plan.x_resident
               else (mp // tm) * kp * cp) * op_isz          # x: resident vs re-streamed
    cost = pl.CostEstimate(
        flops=2 * mp * kp * cp,
        transcendentals=0,
        bytes_accessed=a_bytes + x_bytes + mp * cp * out_isz)

    vmem_need = (plan.a_buffers * tm * tk * op_isz
                 + 2 * (kp if plan.x_resident else tk) * tn * op_isz
                 + 2 * tm * tn * out_isz
                 + (tm * tn * 4 if use_acc else 0))
    vmem_limit = int(min(max(vmem_need + (4 << 20), 32 << 20),
                         plan.vmem_cap - (4 << 20)))
    vmem_limit = max(vmem_limit, vmem_need + (1 << 20))

    kernel = functools.partial(_pool_matmul_kernel, tk=tk,
                               x_resident=plan.x_resident, use_acc=use_acc)
    return pl.pallas_call(
        kernel,
        out_shape=jax.ShapeDtypeStruct((mp, cp), out_dtype),
        grid_spec=pltpu.PrefetchScalarGridSpec(
            num_scalar_prefetch=0,
            grid=grid,
            in_specs=[a_spec, x_spec],
            out_specs=out_spec,
            scratch_shapes=scratch,
        ),
        compiler_params=pltpu.CompilerParams(
            dimension_semantics=("parallel", "parallel", "arbitrary"),
            vmem_limit_bytes=vmem_limit,
        ),
        cost_estimate=cost,
    )(a_p, x_p)


def prepare_pooling_operator(edge_index, edge_attr, n_out_nodes, n_in_nodes,
                             n_channels, x_dtype=jnp.float32,
                             operand_dtype=jnp.bfloat16,
                             max_tk=None, force_x_resident=None):
    """Build the padded pooling operator A ONCE per (static) mesh hierarchy.

    A[dst, src] = sum of edge_attr over duplicate (src, dst) edges (scatter-add
    in f32), written directly into the tile-padded buffer and cast once to the
    low-precision matmul operand dtype.  Per-forward work is only apply_pooling.
    """
    edge_index = jnp.asarray(edge_index)
    edge_attr = jnp.asarray(edge_attr)
    if edge_attr.ndim == 2:
        if edge_attr.shape[-1] != 1:
            raise ValueError("edge_attr must carry a single weight per edge, "
                             f"got shape {edge_attr.shape}")
    elif edge_attr.ndim != 1:
        raise ValueError(f"edge_attr must be [E] or [E, 1], got {edge_attr.shape}")

    plan = _plan_pooling(int(n_out_nodes), int(n_in_nodes), int(n_channels),
                         x_dtype, operand_dtype,
                         max_tk=max_tk, force_x_resident=force_x_resident)

    src = edge_index[0].astype(jnp.int32)
    dst = edge_index[1].astype(jnp.int32)
    w = edge_attr.reshape(-1).astype(jnp.float32)
    a_p = (jnp.zeros((plan.mp, plan.kp), jnp.float32)
           .at[dst, src].add(w)
           .astype(jnp.dtype(plan.operand_dtype)))
    return a_p, plan


@functools.partial(jax.jit, static_argnames=("plan",))
def apply_pooling(a_p, x, plan):
    """Per-forward hot path: cast/pad x, run the tiled MXU matmul, slice."""
    if x.shape != (plan.k, plan.c):
        raise ValueError(f"x has shape {x.shape}, expected {(plan.k, plan.c)}")
    op_dtype = jnp.dtype(plan.operand_dtype)
    x_p = (jnp.zeros((plan.kp, plan.cp), op_dtype)
           .at[:plan.k, :plan.c].set(x.astype(op_dtype)))
    out_p = _pooling_matmul(a_p, x_p, plan, out_dtype=x.dtype)
    return out_p[:plan.m, :plan.c]


def custom_pooling_add(x, edge_index, edge_attr, n_out_nodes,
                       operand_dtype=jnp.bfloat16, **plan_overrides):
    """One-shot convenience: out[d] = sum_e edge_attr[e] * x[src[e]] over dst==d."""
    a_p, plan = prepare_pooling_operator(
        edge_index, edge_attr, int(n_out_nodes), x.shape[0], x.shape[1],
        x_dtype=x.dtype, operand_dtype=operand_dtype, **plan_overrides)
    return apply_pooling(a_p, x, plan)


class ConvBlock5:
    """JAX/Pallas port of _ConvBlock5: forward == CustomPoolingAdd only.

    The padded pooling operator is cached per (pooling arrays, output size,
    x shape/dtype); subsequent forwards only pad x and run the Pallas matmul.
    """

    def __init__(self, in_channels, out_channels, gnn_data=None,
                 operand_dtype=jnp.bfloat16):
        # CustomPoolingAdd has no learnable parameters; args kept for parity.
        del in_channels, out_channels, gnn_data
        self._operand_dtype = operand_dtype
        self._cache = {}

    def __call__(self, x, graph_pool_edge_index, graph_pool_edge_attr,
                 pool_data_forward_n_coarse, **plan_overrides):
        n_coarse = int(pool_data_forward_n_coarse)
        key = (id(graph_pool_edge_index), id(graph_pool_edge_attr), n_coarse,
               tuple(x.shape), str(x.dtype),
               tuple(sorted(plan_overrides.items())))
        prepared = self._cache.get(key)
        if prepared is None:
            prepared = prepare_pooling_operator(
                graph_pool_edge_index, graph_pool_edge_attr, n_coarse,
                x.shape[0], x.shape[1], x_dtype=x.dtype,
                operand_dtype=self._operand_dtype, **plan_overrides)
            self._cache[key] = prepared
        a_p, plan = prepared
        return apply_pooling(a_p, x, plan)


def _max_rel_err(out, ref):
    out = jnp.asarray(out, jnp.float32)
    ref = jnp.asarray(ref, jnp.float32)
    return float(jnp.max(jnp.abs(out - ref)) / (jnp.max(jnp.abs(ref)) + 1e-12))


if __name__ == "__main__":
    key = jax.random.PRNGKey(0)
    k_x, k_src, k_dst, k_attr = jax.random.split(key, 4)

    # --- small case: single grid point after padding ------------------------
    n_fine, n_coarse, channels, n_edges = 32, 8, 16, 64
    x = jax.random.normal(k_x, (n_fine, channels), dtype=jnp.float32)
    src = jax.random.randint(k_src, (n_edges,), 0, n_fine, dtype=jnp.int32)
    dst = jax.random.randint(k_dst, (n_edges,), 0, n_coarse, dtype=jnp.int32)
    edge_index = jnp.stack([src, dst], axis=0)               # [2, E]
    edge_attr = jax.random.normal(k_attr, (n_edges, 1), dtype=jnp.float32)

    block = ConvBlock5(channels, channels)
    out = jax.block_until_ready(block(x, edge_index, edge_attr, n_coarse))
    ref = jax.ops.segment_sum(edge_attr.reshape(-1, 1) * x[src], dst,
                              num_segments=n_coarse)
    assert out.shape == (n_coarse, channels)
    assert _max_rel_err(out, ref) < 5e-2, "small-case mismatch vs reference"

    # --- larger case: 2 i-blocks (megacore-splittable), resident x panel ----
    k2 = jax.random.split(jax.random.PRNGKey(1), 4)
    n_fine2, n_coarse2, channels2, n_edges2 = 384, 200, 192, 2048
    x2 = jax.random.normal(k2[0], (n_fine2, channels2), dtype=jnp.float32)
    src2 = jax.random.randint(k2[1], (n_edges2,), 0, n_fine2, dtype=jnp.int32)
    dst2 = jax.random.randint(k2[2], (n_edges2,), 0, n_coarse2, dtype=jnp.int32)
    ei2 = jnp.stack([src2, dst2], axis=0)
    ea2 = jax.random.normal(k2[3], (n_edges2, 1), dtype=jnp.float32)
    ref2 = jax.ops.segment_sum(ea2.reshape(-1, 1) * x2[src2], dst2,
                               num_segments=n_coarse2)

    out2 = jax.block_until_ready(block(x2, ei2, ea2, n_coarse2))
    assert out2.shape == (n_coarse2, channels2)
    assert _max_rel_err(out2, ref2) < 5e-2, "large-case mismatch vs reference"

    # --- multi-K-step path: forced tk=128 -> 3 K steps, Buffered(3) A stream,
    #     resident x panel sliced per K step inside the kernel ---------------
    out3 = jax.block_until_ready(
        custom_pooling_add(x2, ei2, ea2, n_coarse2, max_tk=128))
    assert _max_rel_err(out3, ref2) < 5e-2, "multi-K-step mismatch vs reference"

    # --- non-resident x path (standard tiled K streaming) -------------------
    out4 = jax.block_until_ready(
        custom_pooling_add(x2, ei2, ea2, n_coarse2, max_tk=128,
                           force_x_resident=False))
    assert _max_rel_err(out4, ref2) < 5e-2, "tiled-x-path mismatch vs reference"

    # --- bf16 output path: f32 VMEM accumulator scratch + finalize cast -----
    out5 = jax.block_until_ready(
        custom_pooling_add(x2.astype(jnp.bfloat16), ei2, ea2, n_coarse2))
    assert out5.dtype == jnp.bfloat16
    assert _max_rel_err(out5, ref2) < 5e-2, "bf16-output mismatch vs reference"

    print("KERNEL_OK")
</pallas_src>

<mosaic_0001>
module attributes {stable_mosaic.version = 11 : i64} {
  func.func @_pool_matmul_kernel(%arg0: i32, %arg1: i32, %arg2: i32, %arg3: memref<8x128xbf16, #tpu.memory_space<vmem>>, %arg4: memref<128x128xbf16, #tpu.memory_space<vmem>>, %arg5: memref<8x128xf32, #tpu.memory_space<vmem>>) attributes {dimension_semantics = [#tpu.dimension_semantics<parallel>, #tpu.dimension_semantics<parallel>, #tpu.dimension_semantics<arbitrary>], iteration_bounds = array<i64: 1, 1, 1>, scalar_prefetch = 0 : i64, scratch_operands = 0 : i64, tpu.core_type = #tpu.core_type<tc>, window_params = [{transform_indices = @transform_0, window_bounds = array<i64: 8, 128>}, {transform_indices = @transform_1, window_bounds = array<i64: 128, 128>}, {transform_indices = @transform_2, window_bounds = array<i64: 8, 128>}]} {
    %c0_i32 = arith.constant 0 : i32
    %0 = arith.cmpi eq, %arg2, %c0_i32 : i32
    %1 = arith.extui %0 : i1 to i32
    %c0_i32_0 = arith.constant 0 : i32
    %2 = arith.cmpi ne, %1, %c0_i32_0 : i32
    scf.if %2 {
      %cst_7 = arith.constant 0.000000e+00 : f32
      %12 = vector.broadcast %cst_7 : f32 to vector<8x128xf32>
      %c0_8 = arith.constant 0 : index
      %c0_9 = arith.constant 0 : index
      %13 = vector.load %arg5[%c0_8, %c0_9] : memref<8x128xf32, #tpu.memory_space<vmem>>, vector<8x128xf32>
      tpu.vector_store %arg5[%c0_8, %c0_9], %12 {strides = array<i32>} : memref<8x128xf32, #tpu.memory_space<vmem>>, vector<8x128xf32>,
    } else {
    }
    %c128_i32 = arith.constant 128 : i32
    %3 = arith.muli %arg2, %c128_i32 : i32
    %4 = tpu.assume_multiple %3, 128 : i32
    %5 = arith.index_cast %4 : i32 to index
    %c0 = arith.constant 0 : index
    %6 = vector.load %arg4[%5, %c0] : memref<128x128xbf16, #tpu.memory_space<vmem>>, vector<128x128xbf16>
    %c0_1 = arith.constant 0 : index
    %c0_2 = arith.constant 0 : index
    %7 = vector.load %arg5[%c0_1, %c0_2] : memref<8x128xf32, #tpu.memory_space<vmem>>, vector<8x128xf32>
    %c0_3 = arith.constant 0 : index
    %c0_4 = arith.constant 0 : index
    %8 = vector.load %arg3[%c0_3, %c0_4] : memref<8x128xbf16, #tpu.memory_space<vmem>>, vector<8x128xbf16>
    %cst = arith.constant dense<0.000000e+00> : vector<8x128xf32>
    %9 = tpu.matmul %8, %6, %cst {dimension_numbers = #tpu.dot_dimension_numbers<[1], [0], [0], [1], [0, 0, 1, 1], [], []>} : vector<8x128xbf16>, vector<128x128xbf16>, vector<8x128xf32> -> vector<8x128xf32>
    %10 = arith.addf %7, %9 : vector<8x128xf32>
    %c0_5 = arith.constant 0 : index
    %c0_6 = arith.constant 0 : index
    %11 = vector.load %arg5[%c0_5, %c0_6] : memref<8x128xf32, #tpu.memory_space<vmem>>, vector<8x128xf32>
    tpu.vector_store %arg5[%c0_5, %c0_6], %10 {strides = array<i32>} : memref<8x128xf32, #tpu.memory_space<vmem>>, vector<8x128xf32>,
    return
  }
  func.func @transform_0(%arg0: i32, %arg1: i32, %arg2: i32) -> (i32, i32) {
    %c0_i32 = arith.constant 0 : i32
    return %arg0, %arg2 : i32, i32
  }
  func.func @transform_1(%arg0: i32, %arg1: i32, %arg2: i32) -> (i32, i32) {
    %c0_i32 = arith.constant 0 : i32
    %c0_i32_0 = arith.constant 0 : i32
    return %c0_i32, %arg1 : i32, i32
  }
  func.func @transform_2(%arg0: i32, %arg1: i32, %arg2: i32) -> (i32, i32) {
    %c0_i32 = arith.constant 0 : i32
    return %arg0, %arg1 : i32, i32
  }
}

</mosaic_0001>

<llo_original>
// kernel: apply_pooling.1
$region0: #{apply_pooling.1}
  #allocation0 [shape = 'u32[]', space=smem, size = 0x4, offset = 0x4, fixed_abs, tag = 'smem constant byte address 0x4 - core index']
  #allocation1 [shape = 'u32[144,128]{1,0:T(1,128)}', space=vmem, size = 0x12000, scoped, tag = 'internal scratch']
  %s0 = inlined_call_operand.vmem [shape: bf16[8,128], index: 0, kind: input, shape index: {}]
  %s1 = inlined_call_operand.vmem [shape: bf16[128,128], index: 1, kind: input, shape index: {}]
  %s2 = inlined_call_operand.hbm [shape: f32[8,128], index: 2, kind: output, shape index: {}]
  %s3 = sld [smem:[#allocation0]]
  $region22: #{apply_pooling.1} parent=0
    _
  %s5 = ssub.s32 1, %s3
  %s6 = scalar_select 0, %s5, %s3
  $region1: #{apply_pooling.1} parent=0
    #allocation2 [shape = 'u8[4096]{0}', space=vmem, size = 0x1000, scoped, tag = 'output window, operand 0, single buffered']
    #allocation3 [shape = 's32[1]{0}', space=sflag, size = 0x4, scoped, tag = 'scoped memory for apply_pooling.1']
    %7 = vsyncpa [#allocation3], 0
    // Predicated region
    $region2: #{apply_pooling.1} parent=1 // pred_check
      _
    $region3: #{apply_pooling.1} parent=1 // pred_check_branch
      %9 = sbr.rel (0) target = $region5
    $region4: #{apply_pooling.1} parent=1 // pred_region
      _
    $region5: #{apply_pooling.1} parent=1 // pred_fallthru
      _
    // Predicated region
    $region6: #{apply_pooling.1} parent=1 // pred_check
      _
    $region7: #{apply_pooling.1} parent=1 // pred_check_branch
      %11 = sbr.rel (0) target = $region9
    $region8: #{apply_pooling.1} parent=1 // pred_region
      _
    $region9: #{apply_pooling.1} parent=1 // pred_fallthru
      _
    %p13 = scmp.eq.s32.totalorder 0, 0
    // Predicated region
    $region10: #{apply_pooling.1} parent=1 // pred_check
      %p14 = pneg %p13
    $region11: #{apply_pooling.1} parent=1 // pred_check_branch
      %16 = sbr.rel (%p14) target = $region13
    $region12: #{apply_pooling.1} parent=1 // pred_region
      %17 = vst [vmem:[#allocation2] sm:$0xff] 0.0
    $region13: #{apply_pooling.1} parent=1 // pred_fallthru
      _
    %s18 = smul.u32 0, 128
    %s19 = sshra.s32 %s18, 3
    %s20 = sand.u32 %s18, 7
    %s21 = smul.addr %s19, 4
    %s22 = scalar_lea.vmem %s1, %s21
    %v23 = vld [vmem:[%s22] sm:$0xf]
    %v24 = vld [vmem:[%s22 + $0x4] sm:$0xf]
    %v25 = vld [vmem:[%s22 + $0x8] sm:$0xf]
    %v26 = vld [vmem:[%s22 + $0xc] sm:$0xf]
    %v27 = vld [vmem:[%s22 + $0x10] sm:$0xf]
    %v28 = vld [vmem:[%s22 + $0x14] sm:$0xf]
    %v29 = vld [vmem:[%s22 + $0x18] sm:$0xf]
    %v30 = vld [vmem:[%s22 + $0x1c] sm:$0xf]
    %v31 = vld [vmem:[%s22 + $0x20] sm:$0xf]
    %v32 = vld [vmem:[%s22 + $0x24] sm:$0xf]
    %v33 = vld [vmem:[%s22 + $0x28] sm:$0xf]
    %v34 = vld [vmem:[%s22 + $0x2c] sm:$0xf]
    %v35 = vld [vmem:[%s22 + $0x30] sm:$0xf]
    %v36 = vld [vmem:[%s22 + $0x34] sm:$0xf]
    %v37 = vld [vmem:[%s22 + $0x38] sm:$0xf]
    %v38 = vld [vmem:[%s22 + $0x3c] sm:$0xf]
    %v39 = vld [vmem:[#allocation2] sm:$0xff]
    %v40 = vld [vmem:[%s0] sm:$0xf]
    %v57 = vunpack.c.l.b16 %v23
    %v58 = vunpack.c.l.b16 %v24
    %v59 = vunpack.c.l.b16 %v25
    %v60 = vunpack.c.l.b16 %v26
    %v61 = vunpack.c.l.b16 %v27
    %v62 = vunpack.c.l.b16 %v28
    %v63 = vunpack.c.l.b16 %v29
    %v64 = vunpack.c.l.b16 %v30
    %v65 = vunpack.c.l.b16 %v31
    %v66 = vunpack.c.l.b16 %v32
    %v67 = vunpack.c.l.b16 %v33
    %v68 = vunpack.c.l.b16 %v34
    %v69 = vunpack.c.l.b16 %v35
    %v70 = vunpack.c.l.b16 %v36
    %v71 = vunpack.c.l.b16 %v37
    %v72 = vunpack.c.l.b16 %v38
    %v73 = vpack.c.b16 %v58, %v57
    %v74 = vpack.c.b16 %v60, %v59
    %v75 = vpack.c.b16 %v62, %v61
    %v76 = vpack.c.b16 %v64, %v63
    %v77 = vpack.c.b16 %v66, %v65
    %v78 = vpack.c.b16 %v68, %v67
    %v79 = vpack.c.b16 %v70, %v69
    %v80 = vpack.c.b16 %v72, %v71
    %89 = vmatprep.subr.bf16.mxu0 0
    %90 = vmatpush1.bf16.msra.mxu0 %v73
    %91 = vmatprep.subr.bf16.mxu0 0
    %92 = vmatpush1.bf16.msra.mxu0 %v74
    %93 = vmatprep.subr.bf16.mxu0 0
    %94 = vmatpush1.bf16.msra.mxu0 %v75
    %95 = vmatprep.subr.bf16.mxu0 0
    %96 = vmatpush1.bf16.msra.mxu0 %v76
    %97 = vmatprep.subr.bf16.mxu0 0
    %98 = vmatpush1.bf16.msra.mxu0 %v77
    %99 = vmatprep.subr.bf16.mxu0 0
    %100 = vmatpush1.bf16.msra.mxu0 %v78
    %101 = vmatprep.subr.bf16.mxu0 0
    %102 = vmatpush1.bf16.msra.mxu0 %v79
    %103 = vmatprep.subr.bf16.mxu0 0
    %104 = vmatpush1.bf16.msra.mxu0 %v80
    %105 = vmatprep.subr.bf16.mxu0 0
    %106 = vmatpush1.bf16.msra.mxu0 0
    %107 = vmatprep.subr.bf16.mxu0 0
    %108 = vmatpush1.bf16.msra.mxu0 0
    %109 = vmatprep.subr.bf16.mxu0 0
    %110 = vmatpush1.bf16.msra.mxu0 0
    %111 = vmatprep.subr.bf16.mxu0 0
    %112 = vmatpush1.bf16.msra.mxu0 0
    %113 = vmatprep.subr.bf16.mxu0 0
    %114 = vmatpush1.bf16.msra.mxu0 0
    %115 = vmatprep.subr.bf16.mxu0 0
    %116 = vmatpush1.bf16.msra.mxu0 0
    %117 = vmatprep.subr.bf16.mxu0 0
    %118 = vmatpush1.bf16.msra.mxu0 0
    %119 = vmatprep.subr.bf16.mxu0 0
    %120 = vmatpush1.bf16.msra.mxu0 0
    %121 = vmatprep.mubr.bf16.mxu0 0
    %122 = vmatmul.mubr.bf16.gmra.mrb[0].mxu0 %v40
    %v123 = vpop.f32.mrb[0].mxu0
    %v124 = vadd.f32 0.0, %v123
    %v125 = vpop.f32.mrb[0].mxu0
    %v126 = vpop.f32.mrb[0].mxu0
    %v127 = vpop.f32.mrb[0].mxu0
    %128 = vdwg.mxu0
    %v129 = vadd.f32 %v39, %v124
    %130 = vst [vmem:[#allocation2] sm:$0xff] %v129
    // Predicated region
    $region14: #{apply_pooling.1} parent=1 // pred_check
      _
    $region15: #{apply_pooling.1} parent=1 // pred_check_branch
      %132 = sbr.rel (0) target = $region17
    $region16: #{apply_pooling.1} parent=1 // pred_region
      %s134 = ssub.s32 128, 128
      %135 = vsyncadd [#allocation3], %s134
      %s137 = sshll.u32 [#allocation2], 4
      %s138 = int_to_ptr.vmem [resolvable:$true] %s137
      %140 = dma.vmem_to_hbm [thread:$0]  %s138, 128, %s2, [#allocation3]
    $region17: #{apply_pooling.1} parent=1 // pred_fallthru
      _
    // Predicated region
    $region18: #{apply_pooling.1} parent=1 // pred_check
      _
    $region19: #{apply_pooling.1} parent=1 // pred_check_branch
      %142 = sbr.rel (0) target = $region21
    $region20: #{apply_pooling.1} parent=1 // pred_region
      %143 = dma.done [#allocation3], 128
    $region21: #{apply_pooling.1} parent=1 // pred_fallthru
      _
    %144 = vsyncpa [#allocation3], 1

</llo_original>
